<compile_context>
chip_gen: v6e
topology: v6e:2x2x1
jax: 0.10.0
libtpu: 0.0.40
codegen_flags: <defaults>
</compile_context>

<pallas_src>
import functools
import math

import jax
import jax.numpy as jnp
from jax import lax
from jax.experimental import pallas as pl
from jax.experimental.pallas import tpu as pltpu


_INV_SQRT2 = 0.7071067811865476
_LANE = 128


def _gelu_exact(y):
    # erf-based GELU, matches torch.nn.GELU(approximate='none')
    return 0.5 * y * (1.0 + lax.erf(y * jnp.float32(_INV_SQRT2)))


def prepare_params(weight, bias, *, lane=_LANE):
    """One-time parameter prep (call once, outside the hot path / jit).

    weight: (H, H) in PyTorch layout (out, in); bias: (H,).
    Returns (w_lane, b_lane, group):
      * group == 1: w_lane = weight.T (kernel computes x @ W^T directly).
      * group  > 1 (H < 128 and 128 % H == 0): w_lane = kron(I_g, weight.T),
        block-diagonal, so the kernel runs on a lane-dense (M/g, g*H)
        row-major view of x with identical math.  w_lane[:H, :H] is still
        weight.T, so the un-widened layout remains available for odd M.
    """
    H = weight.shape[0]
    w_t = jnp.asarray(weight).T                      # (H_in, H_out)
    bias = jnp.asarray(bias)
    if H % lane != 0 and lane % H == 0:
        g = lane // H
        w_lane = jnp.kron(jnp.eye(g, dtype=w_t.dtype), w_t)   # (g*H, g*H)
        b_lane = jnp.tile(bias, g).reshape(1, g * H)
        return w_lane, b_lane, g
    return w_t, bias.reshape(1, H), 1


def _vmem_limits():
    """Per-generation VMEM budget (resident-path threshold) and hard cap."""
    try:
        phys = int(pltpu.get_tpu_info().vmem_capacity_bytes)
    except Exception:
        phys = 64 << 20            # conservative (v7x per-TC size)
    cap = max(int(phys * 3 // 4), 32 << 20)      # leave headroom for scratch
    budget = max(int(phys * 0.65), 24 << 20)
    return budget, cap


def _row_tile(Mw, tm):
    """Row tile: multiple of 8 (or full extent); at least 2 grid steps along M
    whenever there are enough rows, so v7x's two TensorCores both get work."""
    if Mw <= 8:
        return Mw
    half = -(-Mw // 2)
    half = -(-half // 8) * 8              # round up to sublane multiple
    t = min(tm, half)
    return t if t < Mw else Mw


def _pick_tile(full, want):
    """Largest tile <= want that divides `full` and is a multiple of 128."""
    want = min(want, full)
    for cand in range(want, 127, -1):
        if full % cand == 0 and cand % 128 == 0:
            return cand
    return full   # no lane-friendly divisor; fall back to the full extent


def _block_resident_kernel(x_ref, w_ref, b_ref, o_ref, *, matmul_dtype):
    # x_ref: (tm, Hw), w_ref: (Hw, Hw) resident, b_ref: (1, Hw), o_ref: (tm, Hw)
    x = x_ref[...]
    xm, wm = x, w_ref[...]
    if matmul_dtype is not None:
        xm = xm.astype(matmul_dtype)
        wm = wm.astype(matmul_dtype)
    y = jnp.dot(xm, wm, preferred_element_type=jnp.float32)
    y = y + b_ref[...].astype(jnp.float32)
    o_ref[...] = (x.astype(jnp.float32) + _gelu_exact(y)).astype(o_ref.dtype)


def _block_tiled_kernel(xk_ref, w_ref, b_ref, o_ref, acc_ref, xres_ref, *,
                        matmul_dtype):
    # Large-H path: grid = (M tiles, N tiles, K tiles), K innermost
    # ("arbitrary").  tn == tk, so the residual x tile (i, j) is exactly the
    # K-stream tile at k == j; snapshot it into VMEM scratch instead of
    # streaming x a second time from HBM.
    j = pl.program_id(1)
    k = pl.program_id(2)

    @pl.when(k == 0)
    def _():
        acc_ref[...] = jnp.zeros_like(acc_ref)

    @pl.when(k == j)
    def _():
        xres_ref[...] = xk_ref[...]

    a, w = xk_ref[...], w_ref[...]
    if matmul_dtype is not None:
        a = a.astype(matmul_dtype)
        w = w.astype(matmul_dtype)
    acc_ref[...] += jnp.dot(a, w, preferred_element_type=jnp.float32)

    @pl.when(k == pl.num_programs(2) - 1)
    def _():
        y = acc_ref[...] + b_ref[...].astype(jnp.float32)
        o_ref[...] = (xres_ref[...].astype(jnp.float32)
                      + _gelu_exact(y)).astype(o_ref.dtype)


def block_forward(x, w_lane, b_lane, group=1, *, tm=1024, tnk=512,
                  matmul_dtype="auto"):
    """x: (..., H).  w_lane / b_lane / group come from prepare_params.

    matmul_dtype: "auto" (default) keeps f32 MXU inputs on the HBM-bound
    resident path and uses bf16 MXU inputs (f32 accumulate) on the
    compute-bound tiled path; pass None to force exact f32 everywhere or an
    explicit dtype to force it on both paths.  Note bf16 loosens numerics vs
    the f32 torch reference on the tiled (large-H) path only.
    """
    orig_shape = x.shape
    H = orig_shape[-1]
    g = int(group)
    Hw_full = w_lane.shape[0]
    assert w_lane.shape == (Hw_full, Hw_full) and Hw_full == g * H, \
        "params do not match x"

    x2d = x.reshape(-1, H)
    M = x2d.shape[0]

    if g > 1 and M % g == 0:
        # Lane-dense widened row-major view (free reshape, no copy).
        xw = x2d.reshape(M // g, Hw_full)
        w, b, Hw = w_lane, b_lane, Hw_full
    else:
        # Odd row count: use the un-widened weight (top-left block of the kron)
        # instead of padding x -- avoids extra HBM passes over x / out.
        xw = x2d
        w, b, Hw = w_lane[:H, :H], b_lane[:, :H], H

    Mw = xw.shape[0]
    x_bytes = jnp.dtype(x.dtype).itemsize
    w_bytes = jnp.dtype(w.dtype).itemsize
    budget, cap = _vmem_limits()

    if matmul_dtype == "auto":
        mm_resident = None
        mm_tiled = jnp.bfloat16 if jnp.dtype(x.dtype) == jnp.float32 else None
    else:
        mm_resident = mm_tiled = matmul_dtype

    cost = pl.CostEstimate(
        flops=int(2 * Mw * Hw * Hw + 8 * Mw * Hw),
        transcendentals=int(Mw * Hw),
        bytes_accessed=int(2 * Mw * Hw * x_bytes + Hw * Hw * w_bytes
                           + Hw * w_bytes),
    )

    # Resident-path VMEM estimate: single-buffered weight + bias,
    # double-buffered x-in and out row tiles.
    def _resident_bytes(tm_):
        return Hw * Hw * w_bytes + Hw * w_bytes + 4 * tm_ * Hw * x_bytes

    tm_res = _row_tile(Mw, tm)
    resident_est = _resident_bytes(tm_res)
    while resident_est > budget and tm_res > 256:
        tm_res = max(256, (tm_res // 2 // 8) * 8)
        resident_est = _resident_bytes(tm_res)

    if resident_est <= budget:
        # Fast path: whole weight resident (single-buffered) in VMEM, one
        # matmul per row tile.  Ragged last row block is masked by Pallas.
        kernel = functools.partial(_block_resident_kernel,
                                   matmul_dtype=mm_resident)
        out = pl.pallas_call(
            kernel,
            out_shape=jax.ShapeDtypeStruct((Mw, Hw), x.dtype),
            grid=(pl.cdiv(Mw, tm_res),),
            in_specs=[
                pl.BlockSpec((tm_res, Hw), lambda i: (i, 0)),            # x rows
                pl.BlockSpec((Hw, Hw), lambda i: (0, 0),
                             pipeline_mode=pl.Buffered(1)),              # weight
                pl.BlockSpec((1, Hw), lambda i: (0, 0),
                             pipeline_mode=pl.Buffered(1)),              # bias
            ],
            out_specs=pl.BlockSpec((tm_res, Hw), lambda i: (i, 0)),
            compiler_params=pltpu.CompilerParams(
                dimension_semantics=("parallel",),
                vmem_limit_bytes=min(max(resident_est + (4 << 20), 16 << 20),
                                     cap),
            ),
            cost_estimate=cost,
        )(xw, w, b)
    else:
        # Large-H fallback: (M, N, K) tiling with an f32 VMEM accumulator and
        # a VMEM snapshot of the residual tile (tn == tk).  bf16 MXU inputs by
        # default (f32 accumulate; epilogue in f32).
        tnk_eff = _pick_tile(Hw, tnk)

        def _tiled_bytes(tm_):
            return (4 * tm_ * tnk_eff * x_bytes            # x-in + out (x2 buf)
                    + 2 * tnk_eff * tnk_eff * w_bytes       # weight tile (x2 buf)
                    + 2 * tnk_eff * w_bytes                 # bias tile (x2 buf)
                    + tm_ * tnk_eff * 4                     # f32 accumulator
                    + tm_ * tnk_eff * x_bytes)              # residual snapshot

        tm_t = _row_tile(Mw, tm)
        while _tiled_bytes(tm_t) > cap and tm_t > 8:
            tm_t = max(8, (tm_t // 2 // 8) * 8)
        tiled_est = _tiled_bytes(tm_t)

        kernel = functools.partial(_block_tiled_kernel, matmul_dtype=mm_tiled)
        out = pl.pallas_call(
            kernel,
            out_shape=jax.ShapeDtypeStruct((Mw, Hw), x.dtype),
            grid=(pl.cdiv(Mw, tm_t), Hw // tnk_eff, Hw // tnk_eff),
            in_specs=[
                pl.BlockSpec((tm_t, tnk_eff), lambda i, j, k: (i, k)),   # x K-slice
                pl.BlockSpec((tnk_eff, tnk_eff), lambda i, j, k: (k, j)),  # W tile
                pl.BlockSpec((1, tnk_eff), lambda i, j, k: (0, j)),      # bias tile
            ],
            out_specs=pl.BlockSpec((tm_t, tnk_eff), lambda i, j, k: (i, j)),
            scratch_shapes=[pltpu.VMEM((tm_t, tnk_eff), jnp.float32),
                            pltpu.VMEM((tm_t, tnk_eff), x.dtype)],
            compiler_params=pltpu.CompilerParams(
                dimension_semantics=("parallel", "parallel", "arbitrary"),
                vmem_limit_bytes=min(max(tiled_est + (4 << 20), 16 << 20), cap),
            ),
            cost_estimate=cost,
        )(xw, w, b)

    # Undo the lane widening (free, row-major reshape); no slicing needed.
    return out.reshape(-1, H).reshape(orig_shape)


if __name__ == "__main__":
    key = jax.random.PRNGKey(0)
    k_x, k_w, k_b = jax.random.split(key, 3)

    batch, seq, size = 2, 8, 32            # small shapes implied by the module

    x = jax.random.normal(k_x, (batch, seq, size), dtype=jnp.float32)
    bound = 1.0 / math.sqrt(size)
    weight = jax.random.uniform(k_w, (size, size), jnp.float32, -bound, bound)
    bias = jax.random.uniform(k_b, (size,), jnp.float32, -bound, bound)

    # One-time parameter prep (hoisted out of the hot path).
    w_lane, b_lane, g = prepare_params(weight, bias)
    fwd = jax.jit(functools.partial(block_forward, group=g))

    out = jax.block_until_ready(fwd(x, w_lane, b_lane))
    ref = x + jax.nn.gelu(jnp.einsum("bsh,oh->bso", x, weight) + bias,
                          approximate=False)
    assert jnp.allclose(out, ref, atol=1e-5, rtol=1e-5), "mismatch vs reference"

    # Exercise the ragged / un-widened path (row count not a multiple of the
    # lane group) -- no padding, Pallas masks the last row block.
    x2 = jax.random.normal(k_x, (3, 7, size), dtype=jnp.float32)
    out2 = jax.block_until_ready(fwd(x2, w_lane, b_lane))
    ref2 = x2 + jax.nn.gelu(jnp.einsum("bsh,oh->bso", x2, weight) + bias,
                            approximate=False)
    assert jnp.allclose(out2, ref2, atol=1e-5, rtol=1e-5), "mismatch (ragged)"

    print("KERNEL_OK")
</pallas_src>

<mosaic_0001>
module attributes {stable_mosaic.version = 11 : i64} {
  func.func @_block_resident_kernel(%arg0: i32, %arg1: memref<4x128xf32, #tpu.memory_space<vmem>>, %arg2: memref<128x128xf32, #tpu.memory_space<vmem>>, %arg3: memref<1x128xf32, #tpu.memory_space<vmem>>, %arg4: memref<4x128xf32, #tpu.memory_space<vmem>>) attributes {dimension_semantics = [#tpu.dimension_semantics<parallel>], iteration_bounds = array<i64: 1>, scalar_prefetch = 0 : i64, scratch_operands = 0 : i64, tpu.core_type = #tpu.core_type<tc>, window_params = [{transform_indices = @transform_0, window_bounds = array<i64: 4, 128>}, {pipeline_mode = #tpu.pipeline_mode<synchronous>, transform_indices = @transform_1, window_bounds = array<i64: 128, 128>}, {pipeline_mode = #tpu.pipeline_mode<synchronous>, transform_indices = @transform_2, window_bounds = array<i64: 1, 128>}, {transform_indices = @transform_3, window_bounds = array<i64: 4, 128>}]} {
    %c0 = arith.constant 0 : index
    %c0_0 = arith.constant 0 : index
    %0 = vector.load %arg1[%c0, %c0_0] : memref<4x128xf32, #tpu.memory_space<vmem>>, vector<4x128xf32>
    %c0_1 = arith.constant 0 : index
    %c0_2 = arith.constant 0 : index
    %1 = vector.load %arg2[%c0_1, %c0_2] : memref<128x128xf32, #tpu.memory_space<vmem>>, vector<128x128xf32>
    %cst = arith.constant dense<0.000000e+00> : vector<4x128xf32>
    %2 = tpu.matmul %0, %1, %cst {dimension_numbers = #tpu.dot_dimension_numbers<[1], [0], [0], [1], [0, 0, 1, 1], [], []>} : vector<4x128xf32>, vector<128x128xf32>, vector<4x128xf32> -> vector<4x128xf32>
    %c0_3 = arith.constant 0 : index
    %c0_4 = arith.constant 0 : index
    %3 = vector.load %arg3[%c0_3, %c0_4] : memref<1x128xf32, #tpu.memory_space<vmem>>, vector<1x128xf32>
    %4 = vector.broadcast %3 : vector<1x128xf32> to vector<4x128xf32>
    %5 = arith.addf %2, %4 : vector<4x128xf32>
    %cst_5 = arith.constant 5.000000e-01 : f32
    %6 = vector.broadcast %cst_5 : f32 to vector<4x128xf32>
    %7 = arith.mulf %6, %5 : vector<4x128xf32>
    %cst_6 = arith.constant 0.707106769 : f32
    %8 = vector.broadcast %cst_6 : f32 to vector<4x128xf32>
    %9 = arith.mulf %5, %8 : vector<4x128xf32>
    %10 = math.erf %9 : vector<4x128xf32>
    %cst_7 = arith.constant 1.000000e+00 : f32
    %11 = vector.broadcast %cst_7 : f32 to vector<4x128xf32>
    %12 = arith.addf %11, %10 : vector<4x128xf32>
    %13 = arith.mulf %7, %12 : vector<4x128xf32>
    %14 = arith.addf %0, %13 : vector<4x128xf32>
    %c0_8 = arith.constant 0 : index
    %c0_9 = arith.constant 0 : index
    %15 = vector.load %arg4[%c0_8, %c0_9] : memref<4x128xf32, #tpu.memory_space<vmem>>, vector<4x128xf32>
    tpu.vector_store %arg4[%c0_8, %c0_9], %14 {strides = array<i32>} : memref<4x128xf32, #tpu.memory_space<vmem>>, vector<4x128xf32>,
    return
  }
  func.func @transform_0(%arg0: i32) -> (i32, i32) {
    %c0_i32 = arith.constant 0 : i32
    %c0_i32_0 = arith.constant 0 : i32
    return %arg0, %c0_i32 : i32, i32
  }
  func.func @transform_1(%arg0: i32) -> (i32, i32) {
    %c0_i32 = arith.constant 0 : i32
    %c0_i32_0 = arith.constant 0 : i32
    %c0_i32_1 = arith.constant 0 : i32
    return %c0_i32, %c0_i32_0 : i32, i32
  }
  func.func @transform_2(%arg0: i32) -> (i32, i32) {
    %c0_i32 = arith.constant 0 : i32
    %c0_i32_0 = arith.constant 0 : i32
    %c0_i32_1 = arith.constant 0 : i32
    return %c0_i32, %c0_i32_0 : i32, i32
  }
  func.func @transform_3(%arg0: i32) -> (i32, i32) {
    %c0_i32 = arith.constant 0 : i32
    %c0_i32_0 = arith.constant 0 : i32
    return %arg0, %c0_i32 : i32, i32
  }
}

</mosaic_0001>

<llo_original>
// kernel: block_forward.1
$region0: #{block_forward.1}
  #allocation0 [shape = 'u32[]', space=smem, size = 0x4, offset = 0x4, fixed_abs, tag = 'smem constant byte address 0x4 - core index']
  #allocation1 [shape = 'u32[144,128]{1,0:T(1,128)}', space=vmem, size = 0x12000, scoped, tag = 'internal scratch']
  %s0 = inlined_call_operand.vmem [shape: f32[4,128], index: 0, kind: input, shape index: {}]
  %s1 = inlined_call_operand.hbm [shape: f32[128,128], index: 1, kind: input, shape index: {}]
  %s2 = inlined_call_operand.vmem [shape: f32[1,128], index: 2, kind: input, shape index: {}]
  %s3 = inlined_call_operand.vmem [shape: f32[4,128], index: 3, kind: output, shape index: {}]
  %s4 = sld [smem:[#allocation0]]
  $region26: #{block_forward.1} parent=0
    _
  %s6 = ssub.s32 1, %s4
  %s7 = scalar_select 0, %s6, %s4
  $region1: #{block_forward.1} parent=0
    #allocation2 [shape = 'u8[65536]{0}', space=vmem, size = 0x10000, scoped, tag = 'input window, operand 1, single buffered']
    #allocation3 [shape = 's32[1]{0}', space=sflag, size = 0x4, scoped, tag = 'scoped memory for block_forward.1']
    %8 = vsyncpa [#allocation3], 0
    // Predicated region
    $region2: #{block_forward.1} parent=1 // pred_check
      _
    $region3: #{block_forward.1} parent=1 // pred_check_branch
      %10 = sbr.rel (0) target = $region5
    $region4: #{block_forward.1} parent=1 // pred_region
      _
    $region5: #{block_forward.1} parent=1 // pred_fallthru
      _
    // Predicated region
    $region6: #{block_forward.1} parent=1 // pred_check
      _
    $region7: #{block_forward.1} parent=1 // pred_check_branch
      %12 = sbr.rel (0) target = $region9
    $region8: #{block_forward.1} parent=1 // pred_region
      %s14 = ssub.s32 2048, 2048
      %15 = vsyncadd [#allocation3], %s14
      %s16 = sshll.u32 [#allocation2], 4
      %s17 = int_to_ptr.vmem [resolvable:$true] %s16
      %22 = dma.hbm_to_vmem [thread:$0]  %s1, 2048, %s17, [#allocation3], 128, 128, 8
    $region9: #{block_forward.1} parent=1 // pred_fallthru
      _
    // Predicated region
    $region10: #{block_forward.1} parent=1 // pred_check
      _
    $region11: #{block_forward.1} parent=1 // pred_check_branch
      %24 = sbr.rel (0) target = $region13
    $region12: #{block_forward.1} parent=1 // pred_region
      _
    $region13: #{block_forward.1} parent=1 // pred_fallthru
      _
    // Predicated region
    $region14: #{block_forward.1} parent=1 // pred_check
      _
    $region15: #{block_forward.1} parent=1 // pred_check_branch
      %26 = sbr.rel (0) target = $region17
    $region16: #{block_forward.1} parent=1 // pred_region
      %27 = dma.done [#allocation3], 2048
    $region17: #{block_forward.1} parent=1 // pred_fallthru
      _
    %v28 = vld [vmem:[%s0] sm:$0xf]
    %v29 = vld [vmem:[#allocation2] sm:$0xff]
    %v30 = vld [vmem:[#allocation2 + $0x8] sm:$0xff]
    %v31 = vld [vmem:[#allocation2 + $0x10] sm:$0xff]
    %v32 = vld [vmem:[#allocation2 + $0x18] sm:$0xff]
    %v33 = vld [vmem:[#allocation2 + $0x20] sm:$0xff]
    %v34 = vld [vmem:[#allocation2 + $0x28] sm:$0xff]
    %v35 = vld [vmem:[#allocation2 + $0x30] sm:$0xff]
    %v36 = vld [vmem:[#allocation2 + $0x38] sm:$0xff]
    %v37 = vld [vmem:[#allocation2 + $0x40] sm:$0xff]
    %v38 = vld [vmem:[#allocation2 + $0x48] sm:$0xff]
    %v39 = vld [vmem:[#allocation2 + $0x50] sm:$0xff]
    %v40 = vld [vmem:[#allocation2 + $0x58] sm:$0xff]
    %v41 = vld [vmem:[#allocation2 + $0x60] sm:$0xff]
    %v42 = vld [vmem:[#allocation2 + $0x68] sm:$0xff]
    %v43 = vld [vmem:[#allocation2 + $0x70] sm:$0xff]
    %v44 = vld [vmem:[#allocation2 + $0x78] sm:$0xff]
    %v45 = vld [vmem:[%s2] sm:$0x1]
    %v47 = vlaneseq
    %v48 = vshrl.u32 %v47, 7
    %v49 = vsub.s32 0, %v48
    %v50 = vrot.slane %v45, %v49
    %52 = vmatprep.subr.mxu0 0.0
    %53 = vmatpush1.msra.mxu0 %v44
    %54 = vmatprep.subr.mxu0 0.0
    %55 = vmatpush1.msra.mxu0 %v43
    %56 = vmatprep.subr.mxu0 0.0
    %57 = vmatpush1.msra.mxu0 %v42
    %58 = vmatprep.subr.mxu0 0.0
    %59 = vmatpush1.msra.mxu0 %v41
    %60 = vmatprep.subr.mxu0 0.0
    %61 = vmatpush1.msra.mxu0 %v40
    %62 = vmatprep.subr.mxu0 0.0
    %63 = vmatpush1.msra.mxu0 %v39
    %64 = vmatprep.subr.mxu0 0.0
    %65 = vmatpush1.msra.mxu0 %v38
    %66 = vmatprep.subr.mxu0 0.0
    %67 = vmatpush1.msra.mxu0 %v37
    %68 = vmatprep.subr.mxu0 0.0
    %69 = vmatpush1.msra.mxu0 %v36
    %70 = vmatprep.subr.mxu0 0.0
    %71 = vmatpush1.msra.mxu0 %v35
    %72 = vmatprep.subr.mxu0 0.0
    %73 = vmatpush1.msra.mxu0 %v34
    %74 = vmatprep.subr.mxu0 0.0
    %75 = vmatpush1.msra.mxu0 %v33
    %76 = vmatprep.subr.mxu0 0.0
    %77 = vmatpush1.msra.mxu0 %v32
    %78 = vmatprep.subr.mxu0 0.0
    %79 = vmatpush1.msra.mxu0 %v31
    %80 = vmatprep.subr.mxu0 0.0
    %81 = vmatpush1.msra.mxu0 %v30
    %82 = vmatprep.subr.mxu0 0.0
    %83 = vmatpush1.msra.mxu0 %v29
    %84 = vmatprep.subr.mxu0 0.0
    %85 = vmatpush2.msra.mxu0 0.0
    %86 = vmatprep.subr.mxu0 0.0
    %87 = vmatpush2.msra.mxu0 0.0
    %88 = vmatprep.subr.mxu0 0.0
    %89 = vmatpush2.msra.mxu0 0.0
    %90 = vmatprep.subr.mxu0 0.0
    %91 = vmatpush2.msra.mxu0 0.0
    %92 = vmatprep.subr.mxu0 0.0
    %93 = vmatpush2.msra.mxu0 0.0
    %94 = vmatprep.subr.mxu0 0.0
    %95 = vmatpush2.msra.mxu0 0.0
    %96 = vmatprep.subr.mxu0 0.0
    %97 = vmatpush2.msra.mxu0 0.0
    %98 = vmatprep.subr.mxu0 0.0
    %99 = vmatpush2.msra.mxu0 0.0
    %100 = vmatprep.subr.mxu0 0.0
    %101 = vmatpush2.msra.mxu0 0.0
    %102 = vmatprep.subr.mxu0 0.0
    %103 = vmatpush2.msra.mxu0 0.0
    %104 = vmatprep.subr.mxu0 0.0
    %105 = vmatpush2.msra.mxu0 0.0
    %106 = vmatprep.subr.mxu0 0.0
    %107 = vmatpush2.msra.mxu0 0.0
    %108 = vmatprep.subr.mxu0 0.0
    %109 = vmatpush2.msra.mxu0 0.0
    %110 = vmatprep.subr.mxu0 0.0
    %111 = vmatpush2.msra.mxu0 0.0
    %112 = vmatprep.subr.mxu0 0.0
    %113 = vmatpush2.msra.mxu0 0.0
    %114 = vmatprep.subr.mxu0 0.0
    %115 = vmatpush2.msra.mxu0 0.0
    %116 = vmatprep.mubr.f32.mxu0 0.0
    %117 = vmatmul.mubr.f32.gmra.mxu0 %v28
    %v118 = vpop.f32.mrf.mxu0
    %v119 = vadd.f32 %v50, %v118
    %v120 = vpop.f32.mrf.mxu0
    %121 = vdwg.mxu0
    %v122 = vmul.f32 %v119, 0.5
    %v123 = vmul.f32 %v119, 0.70710677
    %v124 = verf.f32.pop %v123
    %v125 = vadd.f32 %v124, 1.0
    %v126 = vmul.f32 %v122, %v125
    %v127 = vadd.f32 %v28, %v126
    %128 = vst [vmem:[%s3] sm:$0xf] %v127
    // Predicated region
    $region18: #{block_forward.1} parent=1 // pred_check
      _
    $region19: #{block_forward.1} parent=1 // pred_check_branch
      %130 = sbr.rel (0) target = $region21
    $region20: #{block_forward.1} parent=1 // pred_region
      _
    $region21: #{block_forward.1} parent=1 // pred_fallthru
      _
    // Predicated region
    $region22: #{block_forward.1} parent=1 // pred_check
      _
    $region23: #{block_forward.1} parent=1 // pred_check_branch
      %132 = sbr.rel (0) target = $region25
    $region24: #{block_forward.1} parent=1 // pred_region
      _
    $region25: #{block_forward.1} parent=1 // pred_fallthru
      _
    %133 = vsyncpa [#allocation3], 1

</llo_original>
